<compile_context>
chip_gen: v7x
topology: tpu7x:2x2x1
jax: 0.10.0
libtpu: 0.0.40
codegen_flags: <defaults>
</compile_context>

<pallas_src>
import jax
import jax.numpy as jnp
from jax.experimental import pallas as pl
from jax.experimental.pallas import tpu as pltpu

NEG_SLOPE = 0.01  # PyTorch nn.LeakyReLU default

D_IN = 784
D_H = 200
D_OUT = 10
D_H_PAD = 256    # hidden padded to a multiple of 128 (full MXU lane tiles)
D_OUT_PAD = 128  # lane-dense output (unmasked vst), sliced to 10 afterwards


def _leaky_relu(x):
    return jnp.where(x > 0, x, NEG_SLOPE * x)


def _round_up(n, m):
    return (n + m - 1) // m * m


def mlp_kernel(x_ref, w1_ref, b1_ref, w2_ref, b2_ref, w3_ref, b3_ref, o_ref):
    # Layer 1: [TB,784] @ [784,256] + [1,256]   (cols 200..255 of the result are 0)
    h = jnp.dot(x_ref[...], w1_ref[...], preferred_element_type=jnp.float32)
    h = _leaky_relu(h + b1_ref[...])
    # Layer 2: [TB,256] @ [256,256] + [1,256]
    h = jnp.dot(h, w2_ref[...], preferred_element_type=jnp.float32)
    h = _leaky_relu(h + b2_ref[...])
    # Layer 3: [TB,256] @ [256,128] + [1,128]   (cols 10..127 are 0)
    h = jnp.dot(h, w3_ref[...], preferred_element_type=jnp.float32)
    h = _leaky_relu(h + b3_ref[...])
    o_ref[...] = h.astype(o_ref.dtype)


def prepare_params(params):
    """One-time conversion of PyTorch-convention params (W:[out,in], b:[out])
    to kernel layout: transposed to [in,out] and zero-padded so every hidden /
    output lane dim is a multiple of 128. Zero padding is exact: padded hidden
    units get bias 0 -> LeakyReLU(0)=0 and feed zero weights downstream."""
    w1 = params["w1"].T.astype(jnp.float32)   # [784, 200]
    w2 = params["w2"].T.astype(jnp.float32)   # [200, 200]
    w3 = params["w3"].T.astype(jnp.float32)   # [200, 10]
    b1 = params["b1"].astype(jnp.float32)
    b2 = params["b2"].astype(jnp.float32)
    b3 = params["b3"].astype(jnp.float32)

    w1p = jnp.zeros((D_IN, D_H_PAD), jnp.float32).at[:, :D_H].set(w1)
    b1p = jnp.zeros((1, D_H_PAD), jnp.float32).at[:, :D_H].set(b1[None, :])
    w2p = jnp.zeros((D_H_PAD, D_H_PAD), jnp.float32).at[:D_H, :D_H].set(w2)
    b2p = jnp.zeros((1, D_H_PAD), jnp.float32).at[:, :D_H].set(b2[None, :])
    w3p = jnp.zeros((D_H_PAD, D_OUT_PAD), jnp.float32).at[:D_H, :D_OUT].set(w3)
    b3p = jnp.zeros((1, D_OUT_PAD), jnp.float32).at[:, :D_OUT].set(b3[None, :])
    return {"w1": w1p, "b1": b1p, "w2": w2p, "b2": b2p, "w3": w3p, "b3": b3p}


def mlp_forward(x, prep, *, block_b=512):
    """x: [B, 784] float32. prep: output of prepare_params(). Returns [B, 10]."""
    B = x.shape[0]
    x = x.astype(jnp.float32)

    tb = min(block_b, _round_up(B, 8))   # batch tile (multiple of 8 sublanes)
    Bp = _round_up(B, tb)
    if Bp != B:
        x = jnp.pad(x, ((0, Bp - B), (0, 0)))
    grid = (Bp // tb,)

    # Weights/biases: same block every grid step -> stay VMEM-resident.
    resident = lambda shape: pl.BlockSpec(shape, lambda i: (0, 0))

    flops = 2 * Bp * (D_IN * D_H_PAD + D_H_PAD * D_H_PAD + D_H_PAD * D_OUT_PAD)
    bytes_accessed = (
        Bp * D_IN * 4 + Bp * D_OUT_PAD * 4
        + (D_IN * D_H_PAD + D_H_PAD * D_H_PAD + D_H_PAD * D_OUT_PAD
           + 2 * D_H_PAD + D_OUT_PAD) * 4)

    out = pl.pallas_call(
        mlp_kernel,
        out_shape=jax.ShapeDtypeStruct((Bp, D_OUT_PAD), jnp.float32),
        grid=grid,
        in_specs=[
            pl.BlockSpec((tb, D_IN), lambda i: (i, 0)),   # x: pipelined over batch
            resident((D_IN, D_H_PAD)), resident((1, D_H_PAD)),
            resident((D_H_PAD, D_H_PAD)), resident((1, D_H_PAD)),
            resident((D_H_PAD, D_OUT_PAD)), resident((1, D_OUT_PAD)),
        ],
        out_specs=pl.BlockSpec((tb, D_OUT_PAD), lambda i: (i, 0)),
        compiler_params=pltpu.CompilerParams(
            dimension_semantics=("parallel",)),
        cost_estimate=pl.CostEstimate(
            flops=flops, transcendentals=0, bytes_accessed=bytes_accessed),
    )(x, prep["w1"], prep["b1"], prep["w2"], prep["b2"], prep["w3"], prep["b3"])

    return out[:B, :D_OUT]


def init_params(key):
    """Deterministic init matching nn.Linear shapes (W: [out, in], b: [out])."""
    ks = jax.random.split(key, 6)
    def uinit(k, shape, fan_in):
        bound = 1.0 / jnp.sqrt(fan_in)
        return jax.random.uniform(k, shape, jnp.float32, -bound, bound)
    return {
        "w1": uinit(ks[0], (200, 784), 784), "b1": uinit(ks[1], (200,), 784),
        "w2": uinit(ks[2], (200, 200), 200), "b2": uinit(ks[3], (200,), 200),
        "w3": uinit(ks[4], (10, 200), 200),  "b3": uinit(ks[5], (10,), 200),
    }


def mlp_reference(x, params):
    h = _leaky_relu(x @ params["w1"].T + params["b1"])
    h = _leaky_relu(h @ params["w2"].T + params["b2"])
    h = _leaky_relu(h @ params["w3"].T + params["b3"])
    return h


if __name__ == "__main__":
    key = jax.random.PRNGKey(0)
    kx, kp = jax.random.split(key)
    B = 8
    x = jax.random.normal(kx, (B, 784), jnp.float32)
    params = init_params(kp)
    prep = prepare_params(params)   # one-time layout prep (transpose + pad)

    out = mlp_forward(x, prep)
    out = jax.block_until_ready(out)

    ref = mlp_reference(x, params)
    assert out.shape == (B, 10), out.shape
    assert jnp.allclose(out, ref, atol=1e-4, rtol=1e-4), "mismatch vs reference"
    print("KERNEL_OK")
</pallas_src>

<mosaic_0001>
module attributes {stable_mosaic.version = 11 : i64} {
  func.func @mlp_kernel(%arg0: i32, %arg1: memref<8x784xf32, #tpu.memory_space<vmem>>, %arg2: memref<784x256xf32, #tpu.memory_space<vmem>>, %arg3: memref<1x256xf32, #tpu.memory_space<vmem>>, %arg4: memref<256x256xf32, #tpu.memory_space<vmem>>, %arg5: memref<1x256xf32, #tpu.memory_space<vmem>>, %arg6: memref<256x128xf32, #tpu.memory_space<vmem>>, %arg7: memref<1x128xf32, #tpu.memory_space<vmem>>, %arg8: memref<8x128xf32, #tpu.memory_space<vmem>>) attributes {dimension_semantics = [#tpu.dimension_semantics<parallel>], iteration_bounds = array<i64: 1>, scalar_prefetch = 0 : i64, scratch_operands = 0 : i64, tpu.core_type = #tpu.core_type<tc>, window_params = [{transform_indices = @transform_0, window_bounds = array<i64: 8, 784>}, {pipeline_mode = #tpu.pipeline_mode<synchronous>, transform_indices = @transform_1, window_bounds = array<i64: 784, 256>}, {pipeline_mode = #tpu.pipeline_mode<synchronous>, transform_indices = @transform_2, window_bounds = array<i64: 1, 256>}, {pipeline_mode = #tpu.pipeline_mode<synchronous>, transform_indices = @transform_3, window_bounds = array<i64: 256, 256>}, {pipeline_mode = #tpu.pipeline_mode<synchronous>, transform_indices = @transform_4, window_bounds = array<i64: 1, 256>}, {pipeline_mode = #tpu.pipeline_mode<synchronous>, transform_indices = @transform_5, window_bounds = array<i64: 256, 128>}, {pipeline_mode = #tpu.pipeline_mode<synchronous>, transform_indices = @transform_6, window_bounds = array<i64: 1, 128>}, {transform_indices = @transform_7, window_bounds = array<i64: 8, 128>}]} {
    %c0 = arith.constant 0 : index
    %c0_0 = arith.constant 0 : index
    %0 = vector.load %arg1[%c0, %c0_0] : memref<8x784xf32, #tpu.memory_space<vmem>>, vector<8x784xf32>
    %c0_1 = arith.constant 0 : index
    %c0_2 = arith.constant 0 : index
    %1 = vector.load %arg2[%c0_1, %c0_2] : memref<784x256xf32, #tpu.memory_space<vmem>>, vector<784x256xf32>
    %cst = arith.constant dense<0.000000e+00> : vector<8x256xf32>
    %2 = tpu.matmul %0, %1, %cst {dimension_numbers = #tpu.dot_dimension_numbers<[1], [0], [0], [1], [0, 0, 1, 1], [], []>} : vector<8x784xf32>, vector<784x256xf32>, vector<8x256xf32> -> vector<8x256xf32>
    %c0_3 = arith.constant 0 : index
    %c0_4 = arith.constant 0 : index
    %3 = vector.load %arg3[%c0_3, %c0_4] : memref<1x256xf32, #tpu.memory_space<vmem>>, vector<1x256xf32>
    %4 = vector.broadcast %3 : vector<1x256xf32> to vector<8x256xf32>
    %5 = arith.addf %2, %4 : vector<8x256xf32>
    %cst_5 = arith.constant 0.000000e+00 : f32
    %6 = vector.broadcast %cst_5 : f32 to vector<8x256xf32>
    %7 = arith.cmpf ogt, %5, %6 : vector<8x256xf32>
    %cst_6 = arith.constant 0.00999999977 : f32
    %8 = vector.broadcast %cst_6 : f32 to vector<8x256xf32>
    %9 = arith.mulf %8, %5 : vector<8x256xf32>
    %10 = arith.select %7, %5, %9 : vector<8x256xi1>, vector<8x256xf32>
    %c0_7 = arith.constant 0 : index
    %c0_8 = arith.constant 0 : index
    %11 = vector.load %arg4[%c0_7, %c0_8] : memref<256x256xf32, #tpu.memory_space<vmem>>, vector<256x256xf32>
    %cst_9 = arith.constant dense<0.000000e+00> : vector<8x256xf32>
    %12 = tpu.matmul %10, %11, %cst_9 {dimension_numbers = #tpu.dot_dimension_numbers<[1], [0], [0], [1], [0, 0, 1, 1], [], []>} : vector<8x256xf32>, vector<256x256xf32>, vector<8x256xf32> -> vector<8x256xf32>
    %c0_10 = arith.constant 0 : index
    %c0_11 = arith.constant 0 : index
    %13 = vector.load %arg5[%c0_10, %c0_11] : memref<1x256xf32, #tpu.memory_space<vmem>>, vector<1x256xf32>
    %14 = vector.broadcast %13 : vector<1x256xf32> to vector<8x256xf32>
    %15 = arith.addf %12, %14 : vector<8x256xf32>
    %cst_12 = arith.constant 0.000000e+00 : f32
    %16 = vector.broadcast %cst_12 : f32 to vector<8x256xf32>
    %17 = arith.cmpf ogt, %15, %16 : vector<8x256xf32>
    %cst_13 = arith.constant 0.00999999977 : f32
    %18 = vector.broadcast %cst_13 : f32 to vector<8x256xf32>
    %19 = arith.mulf %18, %15 : vector<8x256xf32>
    %20 = arith.select %17, %15, %19 : vector<8x256xi1>, vector<8x256xf32>
    %c0_14 = arith.constant 0 : index
    %c0_15 = arith.constant 0 : index
    %21 = vector.load %arg6[%c0_14, %c0_15] : memref<256x128xf32, #tpu.memory_space<vmem>>, vector<256x128xf32>
    %cst_16 = arith.constant dense<0.000000e+00> : vector<8x128xf32>
    %22 = tpu.matmul %20, %21, %cst_16 {dimension_numbers = #tpu.dot_dimension_numbers<[1], [0], [0], [1], [0, 0, 1, 1], [], []>} : vector<8x256xf32>, vector<256x128xf32>, vector<8x128xf32> -> vector<8x128xf32>
    %c0_17 = arith.constant 0 : index
    %c0_18 = arith.constant 0 : index
    %23 = vector.load %arg7[%c0_17, %c0_18] : memref<1x128xf32, #tpu.memory_space<vmem>>, vector<1x128xf32>
    %24 = vector.broadcast %23 : vector<1x128xf32> to vector<8x128xf32>
    %25 = arith.addf %22, %24 : vector<8x128xf32>
    %cst_19 = arith.constant 0.000000e+00 : f32
    %26 = vector.broadcast %cst_19 : f32 to vector<8x128xf32>
    %27 = arith.cmpf ogt, %25, %26 : vector<8x128xf32>
    %cst_20 = arith.constant 0.00999999977 : f32
    %28 = vector.broadcast %cst_20 : f32 to vector<8x128xf32>
    %29 = arith.mulf %28, %25 : vector<8x128xf32>
    %30 = arith.select %27, %25, %29 : vector<8x128xi1>, vector<8x128xf32>
    %c0_21 = arith.constant 0 : index
    %c0_22 = arith.constant 0 : index
    %31 = vector.load %arg8[%c0_21, %c0_22] : memref<8x128xf32, #tpu.memory_space<vmem>>, vector<8x128xf32>
    tpu.vector_store %arg8[%c0_21, %c0_22], %30 {strides = array<i32>} : memref<8x128xf32, #tpu.memory_space<vmem>>, vector<8x128xf32>,
    return
  }
  func.func @transform_0(%arg0: i32) -> (i32, i32) {
    %c0_i32 = arith.constant 0 : i32
    %c0_i32_0 = arith.constant 0 : i32
    return %arg0, %c0_i32 : i32, i32
  }
  func.func @transform_1(%arg0: i32) -> (i32, i32) {
    %c0_i32 = arith.constant 0 : i32
    %c0_i32_0 = arith.constant 0 : i32
    %c0_i32_1 = arith.constant 0 : i32
    return %c0_i32, %c0_i32_0 : i32, i32
  }
  func.func @transform_2(%arg0: i32) -> (i32, i32) {
    %c0_i32 = arith.constant 0 : i32
    %c0_i32_0 = arith.constant 0 : i32
    %c0_i32_1 = arith.constant 0 : i32
    return %c0_i32, %c0_i32_0 : i32, i32
  }
  func.func @transform_3(%arg0: i32) -> (i32, i32) {
    %c0_i32 = arith.constant 0 : i32
    %c0_i32_0 = arith.constant 0 : i32
    %c0_i32_1 = arith.constant 0 : i32
    return %c0_i32, %c0_i32_0 : i32, i32
  }
  func.func @transform_4(%arg0: i32) -> (i32, i32) {
    %c0_i32 = arith.constant 0 : i32
    %c0_i32_0 = arith.constant 0 : i32
    %c0_i32_1 = arith.constant 0 : i32
    return %c0_i32, %c0_i32_0 : i32, i32
  }
  func.func @transform_5(%arg0: i32) -> (i32, i32) {
    %c0_i32 = arith.constant 0 : i32
    %c0_i32_0 = arith.constant 0 : i32
    %c0_i32_1 = arith.constant 0 : i32
    return %c0_i32, %c0_i32_0 : i32, i32
  }
  func.func @transform_6(%arg0: i32) -> (i32, i32) {
    %c0_i32 = arith.constant 0 : i32
    %c0_i32_0 = arith.constant 0 : i32
    %c0_i32_1 = arith.constant 0 : i32
    return %c0_i32, %c0_i32_0 : i32, i32
  }
  func.func @transform_7(%arg0: i32) -> (i32, i32) {
    %c0_i32 = arith.constant 0 : i32
    %c0_i32_0 = arith.constant 0 : i32
    return %arg0, %c0_i32 : i32, i32
  }
}

</mosaic_0001>

<llo_original>
// kernel: tpu_custom_call.1
$region0: #{tpu_custom_call.1}
  #allocation0 [shape = 'u32[]', space=smem, size = 0x4, offset = 0x4, fixed_abs, tag = 'smem constant byte address 0x4 - core index']
  #allocation1 [shape = 'u32[144,128]{1,0:T(1,128)}', space=vmem, size = 0x12000, scoped, tag = 'internal scratch']
  %s0 = inlined_call_operand.hbm [shape: f32[8,784], index: 0, kind: input, shape index: {}]
  %s1 = inlined_call_operand.hbm [shape: f32[784,256], index: 1, kind: input, shape index: {}]
  %s2 = inlined_call_operand.vmem [shape: f32[1,256], index: 2, kind: input, shape index: {}]
  %s3 = inlined_call_operand.hbm [shape: f32[256,256], index: 3, kind: input, shape index: {}]
  %s4 = inlined_call_operand.vmem [shape: f32[1,256], index: 4, kind: input, shape index: {}]
  %s5 = inlined_call_operand.hbm [shape: f32[256,128], index: 5, kind: input, shape index: {}]
  %s6 = inlined_call_operand.vmem [shape: f32[1,128], index: 6, kind: input, shape index: {}]
  %s7 = inlined_call_operand.hbm [shape: f32[8,128], index: 7, kind: output, shape index: {}]
  %s8 = sld [smem:[#allocation0]]
  $region54: #{tpu_custom_call.1} parent=0
    _
  %s10 = ssub.s32 1, %s8
  %s11 = scalar_select 0, %s10, %s8
  $region1: #{tpu_custom_call.1} parent=0
    #allocation2 [shape = 'u8[28672]{0}', space=vmem, size = 0x7000, scoped, tag = 'input window, operand 0, single buffered']
    #allocation3 [shape = 's32[1]{0}', space=sflag, size = 0x4, scoped, tag = 'scoped memory for tpu_custom_call.1']
    #allocation4 [shape = 's32[1]{0}', space=sflag, size = 0x4, scoped, tag = 'scoped memory for tpu_custom_call.1']
    #allocation5 [shape = 'u8[802816]{0}', space=vmem, size = 0xc4000, scoped, tag = 'input window, operand 1, single buffered']
    #allocation6 [shape = 's32[1]{0}', space=sflag, size = 0x4, scoped, tag = 'scoped memory for tpu_custom_call.1']
    #allocation7 [shape = 'u8[262144]{0}', space=vmem, size = 0x40000, scoped, tag = 'input window, operand 3, single buffered']
    #allocation8 [shape = 'u8[131072]{0}', space=vmem, size = 0x20000, scoped, tag = 'input window, operand 5, single buffered']
    #allocation9 [shape = 's32[1]{0}', space=sflag, size = 0x4, scoped, tag = 'scoped memory for tpu_custom_call.1']
    #allocation10 [shape = 'u8[4096]{0}', space=vmem, size = 0x1000, scoped, tag = 'output window, operand 0, single buffered']
    %12 = vsyncpa [#allocation3], 0
    %13 = vsyncpa [#allocation6], 0
    %14 = vsyncpa [#allocation9], 0
    %15 = vsyncpa [#allocation4], 0
    // Predicated region
    $region2: #{tpu_custom_call.1} parent=1 // pred_check
      _
    $region3: #{tpu_custom_call.1} parent=1 // pred_check_branch
      %17 = sbr.rel (0) target = $region5
    $region4: #{tpu_custom_call.1} parent=1 // pred_region
      %s19 = ssub.s32 896, 896
      %20 = vsyncadd [#allocation3], %s19
      %s22 = sshll.u32 [#allocation2], 4
      %s23 = int_to_ptr.vmem [resolvable:$true] %s22
      %25 = dma.hbm_to_vmem [thread:$0]  %s0, 896, %s23, [#allocation3]
    $region5: #{tpu_custom_call.1} parent=1 // pred_fallthru
      _
    // Predicated region
    $region6: #{tpu_custom_call.1} parent=1 // pred_check
      _
    $region7: #{tpu_custom_call.1} parent=1 // pred_check_branch
      %27 = sbr.rel (0) target = $region9
    $region8: #{tpu_custom_call.1} parent=1 // pred_region
      %s29 = ssub.s32 25088, 25088
      %30 = vsyncadd [#allocation6], %s29
      %s31 = sshll.u32 [#allocation5], 4
      %s32 = int_to_ptr.vmem [resolvable:$true] %s31
      %37 = dma.hbm_to_vmem [thread:$0]  %s1, 25088, %s32, [#allocation6], 256, 256, 16
    $region9: #{tpu_custom_call.1} parent=1 // pred_fallthru
      _
    // Predicated region
    $region10: #{tpu_custom_call.1} parent=1 // pred_check
      _
    $region11: #{tpu_custom_call.1} parent=1 // pred_check_branch
      %39 = sbr.rel (0) target = $region13
    $region12: #{tpu_custom_call.1} parent=1 // pred_region
      _
    $region13: #{tpu_custom_call.1} parent=1 // pred_fallthru
      _
    // Predicated region
    $region14: #{tpu_custom_call.1} parent=1 // pred_check
      _
    $region15: #{tpu_custom_call.1} parent=1 // pred_check_branch
      %41 = sbr.rel (0) target = $region17
    $region16: #{tpu_custom_call.1} parent=1 // pred_region
      %s43 = ssub.s32 8192, 8192
      %44 = vsyncadd [#allocation6], %s43
      %s45 = sshll.u32 [#allocation7], 4
      %s46 = int_to_ptr.vmem [resolvable:$true] %s45
      %51 = dma.hbm_to_vmem [thread:$0]  %s3, 8192, %s46, [#allocation6], 256, 256, 16
    $region17: #{tpu_custom_call.1} parent=1 // pred_fallthru
      _
    // Predicated region
    $region18: #{tpu_custom_call.1} parent=1 // pred_check
      _
    $region19: #{tpu_custom_call.1} parent=1 // pred_check_branch
      %53 = sbr.rel (0) target = $region21
    $region20: #{tpu_custom_call.1} parent=1 // pred_region
      _
    $region21: #{tpu_custom_call.1} parent=1 // pred_fallthru
      _
    // Predicated region
    $region22: #{tpu_custom_call.1} parent=1 // pred_check
      _
    $region23: #{tpu_custom_call.1} parent=1 // pred_check_branch
      %55 = sbr.rel (0) target = $region25
    $region24: #{tpu_custom_call.1} parent=1 // pred_region
      %s57 = ssub.s32 4096, 4096
      %58 = vsyncadd [#allocation9], %s57
      %s59 = sshll.u32 [#allocation8], 4
      %s60 = int_to_ptr.vmem [resolvable:$true] %s59
      %65 = dma.hbm_to_vmem [thread:$0]  %s5, 4096, %s60, [#allocation9], 128, 128, 8
    $region25: #{tpu_custom_call.1} parent=1 // pred_fallthru
      _
    // Predicated region
    $region26: #{tpu_custom_call.1} parent=1 // pred_check
      _
    $region27: #{tpu_custom_call.1} parent=1 // pred_check_branch
      %67 = sbr.rel (0) target = $region29
    $region28: #{tpu_custom_call.1} parent=1 // pred_region
      _
    $region29: #{tpu_custom_call.1} parent=1 // pred_fallthru
      _
    // Predicated region
    $region30: #{tpu_custom_call.1} parent=1 // pred_check
      _
    $region31: #{tpu_custom_call.1} parent=1 // pred_check_branch
      %69 = sbr.rel (0) target = $region33
    $region32: #{tpu_custom_call.1} parent=1 // pred_region
      %70 = dma.done [#allocation3], 896
    $region33: #{tpu_custom_call.1} parent=1 // pred_fallthru
      _
    // Predicated region
    $region34: #{tpu_custom_call.1} parent=1 // pred_check
      _
    $region35: #{tpu_custom_call.1} parent=1 // pred_check_branch
      %72 = sbr.rel (0) target = $region37
    $region36: #{tpu_custom_call.1} parent=1 // pred_region
      %73 = dma.done [#allocation6], 25088
    $region37: #{tpu_custom_call.1} parent=1 // pred_fallthru
      _
    // Predicated region
    $region38: #{tpu_custom_call.1} parent=1 // pred_check
      _
    $region39: #{tpu_custom_call.1} parent=1 // pred_check_branch
      %75 = sbr.rel (0) target = $region41
    $region40: #{tpu_custom_call.1} parent=1 // pred_region
      %76 = dma.done [#allocation6], 8192
    $region41: #{tpu_custom_call.1} parent=1 // pred_fallthru
      _
    // Predicated region
    $region42: #{tpu_custom_call.1} parent=1 // pred_check
      _
    $region43: #{tpu_custom_call.1} parent=1 // pred_check_branch
      %78 = sbr.rel (0) target = $region45
    $region44: #{tpu_custom_call.1} parent=1 // pred_region
      %79 = dma.done [#allocation9], 4096
    $region45: #{tpu_custom_call.1} parent=1 // pred_fallthru
      _
    %v80 = vld [vmem:[#allocation2] sm:$0xff]
    %v81 = vld [vmem:[#allocation2 + $0x8] sm:$0xff]
    %v82 = vld [vmem:[#allocation2 + $0x10] sm:$0xff]
    %v83 = vld [vmem:[#allocation2 + $0x18] sm:$0xff]
    %v84 = vld [vmem:[#allocation2 + $0x20] sm:$0xff]
    %v85 = vld [vmem:[#allocation2 + $0x28] sm:$0xff]
    %v86 = vld [vmem:[#allocation2 + $0x30] sm:$0xff]
    %v87 = vld [vmem:[#allocation5] sm:$0xff]
    %v88 = vld [vmem:[#allocation5 + $0x8] sm:$0xff]
    %v89 = vld [vmem:[#allocation5 + $0x10] sm:$0xff]
    %v90 = vld [vmem:[#allocation5 + $0x18] sm:$0xff]
    %v91 = vld [vmem:[#allocation5 + $0x20] sm:$0xff]
    %v92 = vld [vmem:[#allocation5 + $0x28] sm:$0xff]
    %v93 = vld [vmem:[#allocation5 + $0x30] sm:$0xff]
    %v94 = vld [vmem:[#allocation5 + $0x38] sm:$0xff]
    %v95 = vld [vmem:[#allocation5 + $0x40] sm:$0xff]
    %v96 = vld [vmem:[#allocation5 + $0x48] sm:$0xff]
    %v97 = vld [vmem:[#allocation5 + $0x50] sm:$0xff]
    %v98 = vld [vmem:[#allocation5 + $0x58] sm:$0xff]
    %v99 = vld [vmem:[#allocation5 + $0x60] sm:$0xff]
    %v100 = vld [vmem:[#allocation5 + $0x68] sm:$0xff]
    %v101 = vld [vmem:[#allocation5 + $0x70] sm:$0xff]
    %v102 = vld [vmem:[#allocation5 + $0x78] sm:$0xff]
    %v103 = vld [vmem:[#allocation5 + $0x80] sm:$0xff]
    %v104 = vld [vmem:[#allocation5 + $0x88] sm:$0xff]
    %v105 = vld [vmem:[#allocation5 + $0x90] sm:$0xff]
    %v106 = vld [vmem:[#allocation5 + $0x98] sm:$0xff]
    %v107 = vld [vmem:[#allocation5 + $0xa0] sm:$0xff]
    %v108 = vld [vmem:[#allocation5 + $0xa8] sm:$0xff]
    %v109 = vld [vmem:[#allocation5 + $0xb0] sm:$0xff]
    %v110 = vld [vmem:[#allocation5 + $0xb8] sm:$0xff]
    %v111 = vld [vmem:[#allocation5 + $0xc0] sm:$0xff]
    %v112 = vld [vmem:[#allocation5 + $0xc8] sm:$0xff]
    %v113 = vld [vmem:[#allocation5 + $0xd0] sm:$0xff]
    %v114 = vld [vmem:[#allocation5 + $0xd8] sm:$0xff]
    %v115 = vld [vmem:[#allocation5 + $0xe0] sm:$0xff]
    %v116 = vld [vmem:[#allocation5 + $0xe8] sm:$0xff]
    %v117 = vld [vmem:[#allocation5 + $0xf0] sm:$0xff]
    %v118 = vld [vmem:[#allocation5 + $0xf8] sm:$0xff]
    %v119 = vld [vmem:[#allocation5 + $0x100] sm:$0xff]
    %v120 = vld [vmem:[#allocation5 + $0x108] sm:$0xff]
    %v121 = vld [vmem:[#allocation5 + $0x110] sm:$0xff]
    %v122 = vld [vmem:[#allocation5 + $0x118] sm:$0xff]
    %v123 = vld [vmem:[#allocation5 + $0x120] sm:$0xff]
    %v124 = vld [vmem:[#allocation5 + $0x128] sm:$0xff]
    %v125 = vld [vmem:[#allocation5 + $0x130] sm:$0xff]
    %v126 = vld [vmem:[#allocation5 + $0x138] sm:$0xff]
    %v127 = vld [vmem:[#allocation5 + $0x140] sm:$0xff]
    %v128 = vld [vmem:[#allocation5 + $0x148] sm:$0xff]
    %v129 = vld [vmem:[#allocation5 + $0x150] sm:$0xff]
    %v130 = vld [vmem:[#allocation5 + $0x158] sm:$0xff]
    %v131 = vld [vmem:[#allocation5 + $0x160] sm:$0xff]
    %v132 = vld [vmem:[#allocation5 + $0x168] sm:$0xff]
    %v133 = vld [vmem:[#allocation5 + $0x170] sm:$0xff]
    %v134 = vld [vmem:[#allocation5 + $0x178] sm:$0xff]
    %v135 = vld [vmem:[#allocation5 + $0x180] sm:$0xff]
    %v136 = vld [vmem:[#allocation5 + $0x188] sm:$0xff]
    %v137 = vld [vmem:[#allocation5 + $0x190] sm:$0xff]
    %v138 = vld [vmem:[#allocation5 + $0x198] sm:$0xff]
    %v139 = vld [vmem:[#allocation5 + $0x1a0] sm:$0xff]
    %v140 = vld [vmem:[#allocation5 + $0x1a8] sm:$0xff]
    %v141 = vld [vmem:[#allocation5 + $0x1b0] sm:$0xff]
    %v142 = vld [vmem:[#allocation5 + $0x1b8] sm:$0xff]
    %v143 = vld [vmem:[#allocation5 + $0x1c0] sm:$0xff]
    %v144 = vld [vmem:[#allocation5 + $0x1c8] sm:$0xff]
    %v145 = vld [vmem:[#allocation5 + $0x1d0] sm:$0xff]
    %v146 = vld [vmem:[#allocation5 + $0x1d8] sm:$0xff]
    %v147 = vld [vmem:[#allocation5 + $0x1e0] sm:$0xff]
    %v148 = vld [vmem:[#allocation5 + $0x1e8] sm:$0xff]
    %v149 = vld [vmem:[#allocation5 + $0x1f0] sm:$0xff]
    %v150 = vld [vmem:[#allocation5 + $0x1f8] sm:$0xff]
    %v151 = vld [vmem:[#allocation5 + $0x200] sm:$0xff]
    %v152 = vld [vmem:[#allocation5 + $0x208] sm:$0xff]
    %v153 = vld [vmem:[#allocation5 + $0x210] sm:$0xff]
    %v154 = vld [vmem:[#allocation5 + $0x218] sm:$0xff]
    %v155 = vld [vmem:[#allocation5 + $0x220] sm:$0xff]
    %v156 = vld [vmem:[#allocation5 + $0x228] sm:$0xff]
    %v157 = vld [vmem:[#allocation5 + $0x230] sm:$0xff]
    %v158 = vld [vmem:[#allocation5 + $0x238] sm:$0xff]
    %v159 = vld [vmem:[#allocation5 + $0x240] sm:$0xff]
    %v160 = vld [vmem:[#allocation5 + $0x248] sm:$0xff]
    %v161 = vld [vmem:[#allocation5 + $0x250] sm:$0xff]
    %v162 = vld [vmem:[#allocation5 + $0x258] sm:$0xff]
    %v163 = vld [vmem:[#allocation5 + $0x260] sm:$0xff]
    %v164 = vld [vmem:[#allocation5 + $0x268] sm:$0xff]
    %v165 = vld [vmem:[#allocation5 + $0x270] sm:$0xff]
    %v166 = vld [vmem:[#allocation5 + $0x278] sm:$0xff]
    %v167 = vld [vmem:[#allocation5 + $0x280] sm:$0xff]
    %v168 = vld [vmem:[#allocation5 + $0x288] sm:$0xff]
    %v169 = vld [vmem:[#allocation5 + $0x290] sm:$0xff]
    %v170 = vld [vmem:[#allocation5 + $0x298] sm:$0xff]
    %v171 = vld [vmem:[#allocation5 + $0x2a0] sm:$0xff]
    %v172 = vld [vmem:[#allocation5 + $0x2a8] sm:$0xff]
    %v173 = vld [vmem:[#allocation5 + $0x2b0] sm:$0xff]
    %v174 = vld [vmem:[#allocation5 + $0x2b8] sm:$0xff]
    %v175 = vld [vmem:[#allocation5 + $0x2c0] sm:$0xff]
    %v176 = vld [vmem:[#allocation5 + $0x2c8] sm:$0xff]
    %v177 = vld [vmem:[#allocation5 + $0x2d0] sm:$0xff]
    %v178 = vld [vmem:[#allocation5 + $0x2d8] sm:$0xff]
    %v179 = vld [vmem:[#allocation5 + $0x2e0] sm:$0xff]
    %v180 = vld [vmem:[#allocation5 + $0x2e8] sm:$0xff]
    %v181 = vld [vmem:[#allocation5 + $0x2f0] sm:$0xff]
    %v182 = vld [vmem:[#allocation5 + $0x2f8] sm:$0xff]
    %v183 = vld [vmem:[#allocation5 + $0x300] sm:$0xff]
    %v184 = vld [vmem:[#allocation5 + $0x308] sm:$0xff]
    %v185 = vld [vmem:[#allocation5 + $0x310] sm:$0xff]
    %v186 = vld [vmem:[#allocation5 + $0x318] sm:$0xff]
    %v187 = vld [vmem:[#allocation5 + $0x320] sm:$0xff]
    %v188 = vld [vmem:[#allocation5 + $0x328] sm:$0xff]
    %v189 = vld [vmem:[#allocation5 + $0x330] sm:$0xff]
    %v190 = vld [vmem:[#allocation5 + $0x338] sm:$0xff]
    %v191 = vld [vmem:[#allocation5 + $0x340] sm:$0xff]
    %v192 = vld [vmem:[#allocation5 + $0x348] sm:$0xff]
    %v193 = vld [vmem:[#allocation5 + $0x350] sm:$0xff]
    %v194 = vld [vmem:[#allocation5 + $0x358] sm:$0xff]
    %v195 = vld [vmem:[#allocation5 + $0x360] sm:$0xff]
    %v196 = vld [vmem:[#allocation5 + $0x368] sm:$0xff]
    %v197 = vld [vmem:[#allocation5 + $0x370] sm:$0xff]
    %v198 = vld [vmem:[#allocation5 + $0x378] sm:$0xff]
    %v199 = vld [vmem:[#allocation5 + $0x380] sm:$0xff]
    %v200 = vld [vmem:[#allocation5 + $0x388] sm:$0xff]
    %v201 = vld [vmem:[#allocation5 + $0x390] sm:$0xff]
    %v202 = vld [vmem:[#allocation5 + $0x398] sm:$0xff]
    %v203 = vld [vmem:[#allocation5 + $0x3a0] sm:$0xff]
    %v204 = vld [vmem:[#allocation5 + $0x3a8] sm:$0xff]
    %v205 = vld [vmem:[#allocation5 + $0x3b0] sm:$0xff]
    %v206 = vld [vmem:[#allocation5 + $0x3b8] sm:$0xff]
    %v207 = vld [vmem:[#allocation5 + $0x3c0] sm:$0xff]
    %v208 = vld [vmem:[#allocation5 + $0x3c8] sm:$0xff]
    %v209 = vld [vmem:[#allocation5 + $0x3d0] sm:$0xff]
    %v210 = vld [vmem:[#allocation5 + $0x3d8] sm:$0xff]
    %v211 = vld [vmem:[#allocation5 + $0x3e0] sm:$0xff]
    %v212 = vld [vmem:[#allocation5 + $0x3e8] sm:$0xff]
    %v213 = vld [vmem:[#allocation5 + $0x3f0] sm:$0xff]
    %v214 = vld [vmem:[#allocation5 + $0x3f8] sm:$0xff]
    %v215 = vld [vmem:[#allocation5 + $0x400] sm:$0xff]
    %v216 = vld [vmem:[#allocation5 + $0x408] sm:$0xff]
    %v217 = vld [vmem:[#allocation5 + $0x410] sm:$0xff]
    %v218 = vld [vmem:[#allocation5 + $0x418] sm:$0xff]
    %v219 = vld [vmem:[#allocation5 + $0x420] sm:$0xff]
    %v220 = vld [vmem:[#allocation5 + $0x428] sm:$0xff]
    %v221 = vld [vmem:[#allocation5 + $0x430] sm:$0xff]
    %v222 = vld [vmem:[#allocation5 + $0x438] sm:$0xff]
    %v223 = vld [vmem:[#allocation5 + $0x440] sm:$0xff]
    %v224 = vld [vmem:[#allocation5 + $0x448] sm:$0xff]
    %v225 = vld [vmem:[#allocation5 + $0x450] sm:$0xff]
    %v226 = vld [vmem:[#allocation5 + $0x458] sm:$0xff]
    %v227 = vld [vmem:[#allocation5 + $0x460] sm:$0xff]
    %v228 = vld [vmem:[#allocation5 + $0x468] sm:$0xff]
    %v229 = vld [vmem:[#allocation5 + $0x470] sm:$0xff]
    %v230 = vld [vmem:[#allocation5 + $0x478] sm:$0xff]
    %v231 = vld [vmem:[#allocation5 + $0x480] sm:$0xff]
    %v232 = vld [vmem:[#allocation5 + $0x488] sm:$0xff]
    %v233 = vld [vmem:[#allocation5 + $0x490] sm:$0xff]
    %v234 = vld [vmem:[#allocation5 + $0x498] sm:$0xff]
    %v235 = vld [vmem:[#allocation5 + $0x4a0] sm:$0xff]
    %v236 = vld [vmem:[#allocation5 + $0x4a8] sm:$0xff]
    %v237 = vld [vmem:[#allocation5 + $0x4b0] sm:$0xff]
    %v238 = vld [vmem:[#allocation5 + $0x4b8] sm:$0xff]
    %v239 = vld [vmem:[#allocation5 + $0x4c0] sm:$0xff]
    %v240 = vld [vmem:[#allocation5 + $0x4c8] sm:$0xff]
    %v241 = vld [vmem:[#allocation5 + $0x4d0] sm:$0xff]
    %v242 = vld [vmem:[#allocation5 + $0x4d8] sm:$0xff]
    %v243 = vld [vmem:[#allocation5 + $0x4e0] sm:$0xff]
    %v244 = vld [vmem:[#allocation5 + $0x4e8] sm:$0xff]
    %v245 = vld [vmem:[#allocation5 + $0x4f0] sm:$0xff]
    %v246 = vld [vmem:[#allocation5 + $0x4f8] sm:$0xff]
    %v247 = vld [vmem:[#allocation5 + $0x500] sm:$0xff]
    %v248 = vld [vmem:[#allocation5 + $0x508] sm:$0xff]
    %v249 = vld [vmem:[#allocation5 + $0x510] sm:$0xff]
    %v250 = vld [vmem:[#allocation5 + $0x518] sm:$0xff]
    %v251 = vld [vmem:[#allocation5 + $0x520] sm:$0xff]
    %v252 = vld [vmem:[#allocation5 + $0x528] sm:$0xff]
    %v253 = vld [vmem:[#allocation5 + $0x530] sm:$0xff]
    %v254 = vld [vmem:[#allocation5 + $0x538] sm:$0xff]
    %v255 = vld [vmem:[#allocation5 + $0x540] sm:$0xff]
    %v256 = vld [vmem:[#allocation5 + $0x548] sm:$0xff]
    %v257 = vld [vmem:[#allocation5 + $0x550] sm:$0xff]
    %v258 = vld [vmem:[#allocation5 + $0x558] sm:$0xff]
    %v259 = vld [vmem:[#allocation5 + $0x560] sm:$0xff]
    %v260 = vld [vmem:[#allocation5 + $0x568] sm:$0xff]
    %v261 = vld [vmem:[#allocation5 + $0x570] sm:$0xff]
    %v262 = vld [vmem:[#allocation5 + $0x578] sm:$0xff]
    %v263 = vld [vmem:[#allocation5 + $0x580] sm:$0xff]
    %v264 = vld [vmem:[#allocation5 + $0x588] sm:$0xff]
    %v265 = vld [vmem:[#allocation5 + $0x590] sm:$0xff]
    %v266 = vld [vmem:[#allocation5 + $0x598] sm:$0xff]
    %v267 = vld [vmem:[#allocation5 + $0x5a0] sm:$0xff]
    %v268 = vld [vmem:[#allocation5 + $0x5a8] sm:$0xff]
    %v269 = vld [vmem:[#allocation5 + $0x5b0] sm:$0xff]
    %v270 = vld [vmem:[#allocation5 + $0x5b8] sm:$0xff]
    %v271 = vld [vmem:[#allocation5 + $0x5c0] sm:$0xff]
    %v272 = vld [vmem:[#allocation5 + $0x5c8] sm:$0xff]
    %v273 = vld [vmem:[#allocation5 + $0x5d0] sm:$0xff]
    %v274 = vld [vmem:[#allocation5 + $0x5d8] sm:$0xff]
    %v275 = vld [vmem:[#allocation5 + $0x5e0] sm:$0xff]
    %v276 = vld [vmem:[#allocation5 + $0x5e8] sm:$0xff]
    %v277 = vld [vmem:[#allocation5 + $0x5f0] sm:$0xff]
    %v278 = vld [vmem:[#allocation5 + $0x5f8] sm:$0xff]
    %v279 = vld [vmem:[#allocation5 + $0x600] sm:$0xff]
    %v280 = vld [vmem:[#allocation5 + $0x608] sm:$0xff]
    %v281 = vld [vmem:[#allocation5 + $0x610] sm:$0xff]
    %v282 = vld [vmem:[#allocation5 + $0x618] sm:$0xff]
    %v283 = vld [vmem:[%s2] sm:$0x3]
    %v285 = vlaneseq
    %v286 = vshrl.u32 %v285, 7
    %v287 = vsub.s32 0, %v286
    %v288 = vrot.slane %v283, %v287
    %v289 = vlaneseq
    %v290 = vshrl.u32 %v289, 7
    %v291 = vsub.s32 1, %v290
    %v292 = vrot.slane %v283, %v291
    %vm295 = vcmask 130048
    %v297 = vsel %vm295, %v86, 0
    %299 = vmatprep.subr.mxu0 %v88
    %300 = vmatpush1.msra.mxu0 %v87
    %301 = vmatprep.subr.mxu0 %v90
    %302 = vmatpush1.msra.mxu0 %v89
    %303 = vmatprep.subr.mxu0 %v92
    %304 = vmatpush1.msra.mxu0 %v91
    %305 = vmatprep.subr.mxu0 %v94
    %306 = vmatpush1.msra.mxu0 %v93
    %307 = vmatprep.subr.mxu0 %v96
    %308 = vmatpush1.msra.mxu0 %v95
    %309 = vmatprep.subr.mxu0 %v98
    %310 = vmatpush1.msra.mxu0 %v97
    %311 = vmatprep.subr.mxu0 %v100
    %312 = vmatpush1.msra.mxu0 %v99
    %313 = vmatprep.subr.mxu0 %v102
    %314 = vmatpush1.msra.mxu0 %v101
    %315 = vmatprep.subr.mxu0 %v104
    %316 = vmatpush1.msra.mxu0 %v103
    %317 = vmatprep.subr.mxu0 %v106
    %318 = vmatpush1.msra.mxu0 %v105
    %319 = vmatprep.subr.mxu0 %v108
    %320 = vmatpush1.msra.mxu0 %v107
    %321 = vmatprep.subr.mxu0 %v110
    %322 = vmatpush1.msra.mxu0 %v109
    %323 = vmatprep.subr.mxu0 %v112
    %324 = vmatpush1.msra.mxu0 %v111
    %325 = vmatprep.subr.mxu0 %v114
    %326 = vmatpush1.msra.mxu0 %v113
    %327 = vmatprep.subr.mxu0 %v116
    %328 = vmatpush1.msra.mxu0 %v115
    %329 = vmatprep.subr.mxu0 %v118
    %330 = vmatpush1.msra.mxu0 %v117
    %331 = vmatprep.subr.mxu0 %v120
    %332 = vmatpush1.msra.mxu0 %v119
    %333 = vmatprep.subr.mxu0 %v122
    %334 = vmatpush1.msra.mxu0 %v121
    %335 = vmatprep.subr.mxu0 %v124
    %336 = vmatpush1.msra.mxu0 %v123
    %337 = vmatprep.subr.mxu0 %v126
    %338 = vmatpush1.msra.mxu0 %v125
    %339 = vmatprep.subr.mxu0 %v128
    %340 = vmatpush1.msra.mxu0 %v127
    %341 = vmatprep.subr.mxu0 %v130
    %342 = vmatpush1.msra.mxu0 %v129
    %343 = vmatprep.subr.mxu0 %v132
    %344 = vmatpush1.msra.mxu0 %v131
    %345 = vmatprep.subr.mxu0 %v134
    %346 = vmatpush1.msra.mxu0 %v133
    %347 = vmatprep.subr.mxu0 %v136
    %348 = vmatpush1.msra.mxu0 %v135
    %349 = vmatprep.subr.mxu0 %v138
    %350 = vmatpush1.msra.mxu0 %v137
    %351 = vmatprep.subr.mxu0 %v140
    %352 = vmatpush1.msra.mxu0 %v139
    %353 = vmatprep.subr.mxu0 %v142
    %354 = vmatpush1.msra.mxu0 %v141
    %355 = vmatprep.subr.mxu0 %v144
    %356 = vmatpush1.msra.mxu0 %v143
    %357 = vmatprep.subr.mxu0 %v146
    %358 = vmatpush1.msra.mxu0 %v145
    %359 = vmatprep.subr.mxu0 %v148
    %360 = vmatpush1.msra.mxu0 %v147
    %361 = vmatprep.subr.mxu0 %v150
    %362 = vmatpush1.msra.mxu0 %v149
    %363 = vmatprep.mubr.f32.mxu0 %v81
    %364 = vmatmul.mubr.f32.gmra.mrb[0].mxu0 %v80
    %v365 = vpop.f32.mrb[0].mxu0
    %v366 = vadd.f32 %v288, %v365
    %v367 = vpop.f32.mrb[0].mxu0
    %v368 = vadd.f32 %v292, %v367
    %369 = vdwg.mxu0
    %370 = vmatprep.subr.mxu0 %v152
    %371 = vmatpush1.msra.mxu0 %v151
    %372 = vmatprep.subr.mxu0 %v154
    %373 = vmatpush1.msra.mxu0 %v153
    %374 = vmatprep.subr.mxu0 %v156
    %375 = vmatpush1.msra.mxu0 %v155
    %376 = vmatprep.subr.mxu0 %v158
    %377 = vmatpush1.msra.mxu0 %v157
    %378 = vmatprep.subr.mxu0 %v160
    %379 = vmatpush1.msra.mxu0 %v159
    %380 = vmatprep.subr.mxu0 %v162
    %381 = vmatpush1.msra.mxu0 %v161
    %382 = vmatprep.subr.mxu0 %v164
    %383 = vmatpush1.msra.mxu0 %v163
    %384 = vmatprep.subr.mxu0 %v166
    %385 = vmatpush1.msra.mxu0 %v165
    %386 = vmatprep.subr.mxu0 %v168
    %387 = vmatpush1.msra.mxu0 %v167
    %388 = vmatprep.subr.mxu0 %v170
    %389 = vmatpush1.msra.mxu0 %v169
    %390 = vmatprep.subr.mxu0 %v172
    %391 = vmatpush1.msra.mxu0 %v171
    %392 = vmatprep.subr.mxu0 %v174
    %393 = vmatpush1.msra.mxu0 %v173
    %394 = vmatprep.subr.mxu0 %v176
    %395 = vmatpush1.msra.mxu0 %v175
    %396 = vmatprep.subr.mxu0 %v178
    %397 = vmatpush1.msra.mxu0 %v177
    %398 = vmatprep.subr.mxu0 %v180
    %399 = vmatpush1.msra.mxu0 %v179
    %400 = vmatprep.subr.mxu0 %v182
    %401 = vmatpush1.msra.mxu0 %v181
    %402 = vmatprep.subr.mxu0 %v184
    %403 = vmatpush1.msra.mxu0 %v183
    %404 = vmatprep.subr.mxu0 %v186
    %405 = vmatpush1.msra.mxu0 %v185
    %406 = vmatprep.subr.mxu0 %v188
    %407 = vmatpush1.msra.mxu0 %v187
    %408 = vmatprep.subr.mxu0 %v190
    %409 = vmatpush1.msra.mxu0 %v189
    %410 = vmatprep.subr.mxu0 %v192
    %411 = vmatpush1.msra.mxu0 %v191
    %412 = vmatprep.subr.mxu0 %v194
    %413 = vmatpush1.msra.mxu0 %v193
    %414 = vmatprep.subr.mxu0 %v196
    %415 = vmatpush1.msra.mxu0 %v195
    %416 = vmatprep.subr.mxu0 %v198
    %417 = vmatpush1.msra.mxu0 %v197
    %418 = vmatprep.subr.mxu0 %v200
    %419 = vmatpush1.msra.mxu0 %v199
    %420 = vmatprep.subr.mxu0 %v202
    %421 = vmatpush1.msra.mxu0 %v201
    %422 = vmatprep.subr.mxu0 %v204
    %423 = vmatpush1.msra.mxu0 %v203
    %424 = vmatprep.subr.mxu0 %v206
    %425 = vmatpush1.msra.mxu0 %v205
    %426 = vmatprep.subr.mxu0 %v208
    %427 = vmatpush1.msra.mxu0 %v207
    %428 = vmatprep.subr.mxu0 %v210
    %429 = vmatpush1.msra.mxu0 %v209
    %430 = vmatprep.subr.mxu0 %v212
    %431 = vmatpush1.msra.mxu0 %v211
    %432 = vmatprep.subr.mxu0 %v214
    %433 = vmatpush1.msra.mxu0 %v213
    %434 = vmatprep.mubr.f32.mxu0 %v83
    %435 = vmatmul.mubr.f32.gmra.mrb[0].mxu0 %v82
    %v436 = vpop.f32.mrb[0].mxu0
    %v437 = vadd.f32 %v366, %v436
    %v438 = vpop.f32.mrb[0].mxu0
    %v439 = vadd.f32 %v368, %v438
    %440 = vdwg.mxu0
    %441 = vmatprep.subr.mxu0 %v216
    %442 = vmatpush1.msra.mxu0 %v215
    %443 = vmatprep.subr.mxu0 %v218
    %444 = vmatpush1.msra.mxu0 %v217
    %445 = vmatprep.subr.mxu0 %v220
    %446 = vmatpush1.msra.mxu0 %v219
    %447 = vmatprep.subr.mxu0 %v222
    %448 = vmatpush1.msra.mxu0 %v221
    %449 = vmatprep.subr.mxu0 %v224
    %450 = vmatpush1.msra.mxu0 %v223
    %451 = vmatprep.subr.mxu0 %v226
    %452 = vmatpush1.msra.mxu0 %v225
    %453 = vmatprep.subr.mxu0 %v228
    %454 = vmatpush1.msra.mxu0 %v227
    %455 = vmatprep.subr.mxu0 %v230
    %456 = vmatpush1.msra.mxu0 %v229
    %457 = vmatprep.subr.mxu0 %v232
    %458 = vmatpush1.msra.mxu0 %v231
    %459 = vmatprep.subr.mxu0 %v234
    %460 = vmatpush1.msra.mxu0 %v233
    %461 = vmatprep.subr.mxu0 %v236
    %462 = vmatpush1.msra.mxu0 %v235
    %463 = vmatprep.subr.mxu0 %v238
    %464 = vmatpush1.msra.mxu0 %v237
    %465 = vmatprep.subr.mxu0 %v240
    %466 = vmatpush1.msra.mxu0 %v239
    %467 = vmatprep.subr.mxu0 %v242
    %468 = vmatpush1.msra.mxu0 %v241
    %469 = vmatprep.subr.mxu0 %v244
    %470 = vmatpush1.msra.mxu0 %v243
    %471 = vmatprep.subr.mxu0 %v246
    %472 = vmatpush1.msra.mxu0 %v245
    %473 = vmatprep.subr.mxu0 %v248
    %474 = vmatpush1.msra.mxu0 %v247
    %475 = vmatprep.subr.mxu0 %v250
    %476 = vmatpush1.msra.mxu0 %v249
    %477 = vmatprep.subr.mxu0 %v252
    %478 = vmatpush1.msra.mxu0 %v251
    %479 = vmatprep.subr.mxu0 %v254
    %480 = vmatpush1.msra.mxu0 %v253
    %481 = vmatprep.subr.mxu0 %v256
    %482 = vmatpush1.msra.mxu0 %v255
    %483 = vmatprep.subr.mxu0 %v258
    %484 = vmatpush1.msra.mxu0 %v257
    %485 = vmatprep.subr.mxu0 %v260
    %486 = vmatpush1.msra.mxu0 %v259
    %487 = vmatprep.subr.mxu0 %v262
    %488 = vmatpush1.msra.mxu0 %v261
    %489 = vmatprep.subr.mxu0 %v264
    %490 = vmatpush1.msra.mxu0 %v263
    %491 = vmatprep.subr.mxu0 %v266
    %492 = vmatpush1.msra.mxu0 %v265
    %493 = vmatprep.subr.mxu0 %v268
    %494 = vmatpush1.msra.mxu0 %v267
    %495 = vmatprep.subr.mxu0 %v270
    %496 = vmatpush1.msra.mxu0 %v269
    %497 = vmatprep.subr.mxu0 %v272
    %498 = vmatpush1.msra.mxu0 %v271
    %499 = vmatprep.subr.mxu0 %v274
    %500 = vmatpush1.msra.mxu0 %v273
    %501 = vmatprep.subr.mxu0 %v276
    %502 = vmatpush1.msra.mxu0 %v275
    %503 = vmatprep.subr.mxu0 %v278
    %504 = vmatpush1.msra.mxu0 %v277
    %505 = vmatprep.mubr.f32.mxu0 %v85
    %506 = vmatmul.mubr.f32.gmra.mrb[0].mxu0 %v84
    %v507 = vpop.f32.mrb[0].mxu0
    %v508 = vadd.f32 %v437, %v507
    %v509 = vpop.f32.mrb[0].mxu0
    %v510 = vadd.f32 %v439, %v509
    %511 = vdwg.mxu0
    %512 = vmatprep.subr.mxu0 %v280
    %513 = vmatpush1.msra.mxu0 %v279
    %514 = vmatprep.subr.mxu0 %v282
    %515 = vmatpush1.msra.mxu0 %v281
    %516 = vmatprep.subr.mxu0 0.0
    %517 = vmatpush1.msra.mxu0 0.0
    %518 = vmatprep.subr.mxu0 0.0
    %519 = vmatpush1.msra.mxu0 0.0
    %520 = vmatprep.subr.mxu0 0.0
    %521 = vmatpush1.msra.mxu0 0.0
    %522 = vmatprep.subr.mxu0 0.0
    %523 = vmatpush1.msra.mxu0 0.0
    %524 = vmatprep.subr.mxu0 0.0
    %525 = vmatpush1.msra.mxu0 0.0
    %526 = vmatprep.subr.mxu0 0.0
    %527 = vmatpush1.msra.mxu0 0.0
    %528 = vmatprep.subr.mxu0 0.0
    %529 = vmatpush1.msra.mxu0 0.0
    %530 = vmatprep.subr.mxu0 0.0
    %531 = vmatpush1.msra.mxu0 0.0
    %532 = vmatprep.subr.mxu0 0.0
    %533 = vmatpush1.msra.mxu0 0.0
    %534 = vmatprep.subr.mxu0 0.0
    %535 = vmatpush1.msra.mxu0 0.0
    %536 = vmatprep.subr.mxu0 0.0
    %537 = vmatpush1.msra.mxu0 0.0
    %538 = vmatprep.subr.mxu0 0.0
    %539 = vmatpush1.msra.mxu0 0.0
    %540 = vmatprep.subr.mxu0 0.0
    %541 = vmatpush1.msra.mxu0 0.0
    %542 = vmatprep.subr.mxu0 0.0
    %543 = vmatpush1.msra.mxu0 0.0
    %544 = vmatprep.subr.mxu0 0.0
    %545 = vmatpush1.msra.mxu0 0.0
    %546 = vmatprep.subr.mxu0 0.0
    %547 = vmatpush1.msra.mxu0 0.0
    %548 = vmatprep.subr.mxu0 0.0
    %549 = vmatpush1.msra.mxu0 0.0
    %550 = vmatprep.subr.mxu0 0.0
    %551 = vmatpush1.msra.mxu0 0.0
    %552 = vmatprep.subr.mxu0 0.0
    %553 = vmatpush1.msra.mxu0 0.0
    %554 = vmatprep.subr.mxu0 0.0
    %555 = vmatpush1.msra.mxu0 0.0
    %556 = vmatprep.subr.mxu0 0.0
    %557 = vmatpush1.msra.mxu0 0.0
    %558 = vmatprep.subr.mxu0 0.0
    %559 = vmatpush1.msra.mxu0 0.0
    %560 = vmatprep.subr.mxu0 0.0
    %561 = vmatpush1.msra.mxu0 0.0
    %562 = vmatprep.subr.mxu0 0.0
    %563 = vmatpush1.msra.mxu0 0.0
    %564 = vmatprep.subr.mxu0 0.0
    %565 = vmatpush1.msra.mxu0 0.0
    %566 = vmatprep.subr.mxu0 0.0
    %567 = vmatpush1.msra.mxu0 0.0
    %568 = vmatprep.subr.mxu0 0.0
    %569 = vmatpush1.msra.mxu0 0.0
    %570 = vmatprep.subr.mxu0 0.0
    %571 = vmatpush1.msra.mxu0 0.0
    %572 = vmatprep.subr.mxu0 0.0
    %573 = vmatpush1.msra.mxu0 0.0
    %574 = vmatprep.subr.mxu0 0.0
    %575 = vmatpush1.msra.mxu0 0.0
    %576 = vmatprep.mubr.f32.mxu0 0.0
    %577 = vmatmul.mubr.f32.gmra.mrb[0].mxu0 %v297
    %v578 = vpop.f32.mrb[0].mxu0
    %v579 = vadd.f32 %v508, %v578
    %v580 = vpop.f32.mrb[0].mxu0
    %v581 = vadd.f32 %v510, %v580
    %582 = vdwg.mxu0
    %vm583 = vcmp.gt.f32.partialorder %v579, 0.0
    %vm584 = vcmp.gt.f32.partialorder %v581, 0.0
    %v585 = vmul.f32 %v579, 0.01
    %v586 = vmul.f32 %v581, 0.01
    %v587 = vsel %vm583, %v579, %v585
    %v588 = vsel %vm584, %v581, %v586
    %v589 = vld [vmem:[#allocation7] sm:$0xff]
    %v590 = vld [vmem:[#allocation7 + $0x8] sm:$0xff]
    %v591 = vld [vmem:[#allocation7 + $0x10] sm:$0xff]
    %v592 = vld [vmem:[#allocation7 + $0x18] sm:$0xff]
    %v593 = vld [vmem:[#allocation7 + $0x20] sm:$0xff]
    %v594 = vld [vmem:[#allocation7 + $0x28] sm:$0xff]
    %v595 = vld [vmem:[#allocation7 + $0x30] sm:$0xff]
    %v596 = vld [vmem:[#allocation7 + $0x38] sm:$0xff]
    %v597 = vld [vmem:[#allocation7 + $0x40] sm:$0xff]
    %v598 = vld [vmem:[#allocation7 + $0x48] sm:$0xff]
    %v599 = vld [vmem:[#allocation7 + $0x50] sm:$0xff]
    %v600 = vld [vmem:[#allocation7 + $0x58] sm:$0xff]
    %v601 = vld [vmem:[#allocation7 + $0x60] sm:$0xff]
    %v602 = vld [vmem:[#allocation7 + $0x68] sm:$0xff]
    %v603 = vld [vmem:[#allocation7 + $0x70] sm:$0xff]
    %v604 = vld [vmem:[#allocation7 + $0x78] sm:$0xff]
    %v605 = vld [vmem:[#allocation7 + $0x80] sm:$0xff]
    %v606 = vld [vmem:[#allocation7 + $0x88] sm:$0xff]
    %v607 = vld [vmem:[#allocation7 + $0x90] sm:$0xff]
    %v608 = vld [vmem:[#allocation7 + $0x98] sm:$0xff]
    %v609 = vld [vmem:[#allocation7 + $0xa0] sm:$0xff]
    %v610 = vld [vmem:[#allocation7 + $0xa8] sm:$0xff]
    %v611 = vld [vmem:[#allocation7 + $0xb0] sm:$0xff]
    %v612 = vld [vmem:[#allocation7 + $0xb8] sm:$0xff]
    %v613 = vld [vmem:[#allocation7 + $0xc0] sm:$0xff]
    %v614 = vld [vmem:[#allocation7 + $0xc8] sm:$0xff]
    %v615 = vld [vmem:[#allocation7 + $0xd0] sm:$0xff]
    %v616 = vld [vmem:[#allocation7 + $0xd8] sm:$0xff]
    %v617 = vld [vmem:[#allocation7 + $0xe0] sm:$0xff]
    %v618 = vld [vmem:[#allocation7 + $0xe8] sm:$0xff]
    %v619 = vld [vmem:[#allocation7 + $0xf0] sm:$0xff]
    %v620 = vld [vmem:[#allocation7 + $0xf8] sm:$0xff]
    %v621 = vld [vmem:[#allocation7 + $0x100] sm:$0xff]
    %v622 = vld [vmem:[#allocation7 + $0x108] sm:$0xff]
    %v623 = vld [vmem:[#allocation7 + $0x110] sm:$0xff]
    %v624 = vld [vmem:[#allocation7 + $0x118] sm:$0xff]
    %v625 = vld [vmem:[#allocation7 + $0x120] sm:$0xff]
    %v626 = vld [vmem:[#allocation7 + $0x128] sm:$0xff]
    %v627 = vld [vmem:[#allocation7 + $0x130] sm:$0xff]
    %v628 = vld [vmem:[#allocation7 + $0x138] sm:$0xff]
    %v629 = vld [vmem:[#allocation7 + $0x140] sm:$0xff]
    %v630 = vld [vmem:[#allocation7 + $0x148] sm:$0xff]
    %v631 = vld [vmem:[#allocation7 + $0x150] sm:$0xff]
    %v632 = vld [vmem:[#allocation7 + $0x158] sm:$0xff]
    %v633 = vld [vmem:[#allocation7 + $0x160] sm:$0xff]
    %v634 = vld [vmem:[#allocation7 + $0x168] sm:$0xff]
    %v635 = vld [vmem:[#allocation7 + $0x170] sm:$0xff]
    %v636 = vld [vmem:[#allocation7 + $0x178] sm:$0xff]
    %v637 = vld [vmem:[#allocation7 + $0x180] sm:$0xff]
    %v638 = vld [vmem:[#allocation7 + $0x188] sm:$0xff]
    %v639 = vld [vmem:[#allocation7 + $0x190] sm:$0xff]
    %v640 = vld [vmem:[#allocation7 + $0x198] sm:$0xff]
    %v641 = vld [vmem:[#allocation7 + $0x1a0] sm:$0xff]
    %v642 = vld [vmem:[#allocation7 + $0x1a8] sm:$0xff]
    %v643 = vld [vmem:[#allocation7 + $0x1b0] sm:$0xff]
    %v644 = vld [vmem:[#allocation7 + $0x1b8] sm:$0xff]
    %v645 = vld [vmem:[#allocation7 + $0x1c0] sm:$0xff]
    %v646 = vld [vmem:[#allocation7 + $0x1c8] sm:$0xff]
    %v647 = vld [vmem:[#allocation7 + $0x1d0] sm:$0xff]
    %v648 = vld [vmem:[#allocation7 + $0x1d8] sm:$0xff]
    %v649 = vld [vmem:[#allocation7 + $0x1e0] sm:$0xff]
    %v650 = vld [vmem:[#allocation7 + $0x1e8] sm:$0xff]
    %v651 = vld [vmem:[#allocation7 + $0x1f0] sm:$0xff]
    %v652 = vld [vmem:[#allocation7 + $0x1f8] sm:$0xff]
    %v653 = vld [vmem:[%s4] sm:$0x3]
    %v655 = vlaneseq
    %v656 = vshrl.u32 %v655, 7
    %v657 = vsub.s32 0, %v656
    %v658 = vrot.slane %v653, %v657
    %v659 = vlaneseq
    %v660 = vshrl.u32 %v659, 7
    %v661 = vsub.s32 1, %v660
    %v662 = vrot.slane %v653, %v661
    %665 = vmatprep.subr.mxu0 %v590
    %666 = vmatpush1.msra.mxu0 %v589
    %667 = vmatprep.subr.mxu0 %v592
    %668 = vmatpush1.msra.mxu0 %v591
    %669 = vmatprep.subr.mxu0 %v594
    %670 = vmatpush1.msra.mxu0 %v593
    %671 = vmatprep.subr.mxu0 %v596
    %672 = vmatpush1.msra.mxu0 %v595
    %673 = vmatprep.subr.mxu0 %v598
    %674 = vmatpush1.msra.mxu0 %v597
    %675 = vmatprep.subr.mxu0 %v600
    %676 = vmatpush1.msra.mxu0 %v599
    %677 = vmatprep.subr.mxu0 %v602
    %678 = vmatpush1.msra.mxu0 %v601
    %679 = vmatprep.subr.mxu0 %v604
    %680 = vmatpush1.msra.mxu0 %v603
    %681 = vmatprep.subr.mxu0 %v606
    %682 = vmatpush1.msra.mxu0 %v605
    %683 = vmatprep.subr.mxu0 %v608
    %684 = vmatpush1.msra.mxu0 %v607
    %685 = vmatprep.subr.mxu0 %v610
    %686 = vmatpush1.msra.mxu0 %v609
    %687 = vmatprep.subr.mxu0 %v612
    %688 = vmatpush1.msra.mxu0 %v611
    %689 = vmatprep.subr.mxu0 %v614
    %690 = vmatpush1.msra.mxu0 %v613
    %691 = vmatprep.subr.mxu0 %v616
    %692 = vmatpush1.msra.mxu0 %v615
    %693 = vmatprep.subr.mxu0 %v618
    %694 = vmatpush1.msra.mxu0 %v617
    %695 = vmatprep.subr.mxu0 %v620
    %696 = vmatpush1.msra.mxu0 %v619
    %697 = vmatprep.subr.mxu0 %v622
    %698 = vmatpush1.msra.mxu0 %v621
    %699 = vmatprep.subr.mxu0 %v624
    %700 = vmatpush1.msra.mxu0 %v623
    %701 = vmatprep.subr.mxu0 %v626
    %702 = vmatpush1.msra.mxu0 %v625
    %703 = vmatprep.subr.mxu0 %v628
    %704 = vmatpush1.msra.mxu0 %v627
    %705 = vmatprep.subr.mxu0 %v630
    %706 = vmatpush1.msra.mxu0 %v629
    %707 = vmatprep.subr.mxu0 %v632
    %708 = vmatpush1.msra.mxu0 %v631
    %709 = vmatprep.subr.mxu0 %v634
    %710 = vmatpush1.msra.mxu0 %v633
    %711 = vmatprep.subr.mxu0 %v636
    %712 = vmatpush1.msra.mxu0 %v635
    %713 = vmatprep.subr.mxu0 %v638
    %714 = vmatpush1.msra.mxu0 %v637
    %715 = vmatprep.subr.mxu0 %v640
    %716 = vmatpush1.msra.mxu0 %v639
    %717 = vmatprep.subr.mxu0 %v642
    %718 = vmatpush1.msra.mxu0 %v641
    %719 = vmatprep.subr.mxu0 %v644
    %720 = vmatpush1.msra.mxu0 %v643
    %721 = vmatprep.subr.mxu0 %v646
    %722 = vmatpush1.msra.mxu0 %v645
    %723 = vmatprep.subr.mxu0 %v648
    %724 = vmatpush1.msra.mxu0 %v647
    %725 = vmatprep.subr.mxu0 %v650
    %726 = vmatpush1.msra.mxu0 %v649
    %727 = vmatprep.subr.mxu0 %v652
    %728 = vmatpush1.msra.mxu0 %v651
    %729 = vmatprep.mubr.f32.mxu0 %v588
    %730 = vmatmul.mubr.f32.gmra.mrb[0].mxu0 %v587
    %v731 = vpop.f32.mrb[0].mxu0
    %v732 = vadd.f32 %v658, %v731
    %v733 = vpop.f32.mrb[0].mxu0
    %v734 = vadd.f32 %v662, %v733
    %735 = vdwg.mxu0
    %vm736 = vcmp.gt.f32.partialorder %v732, 0.0
    %vm737 = vcmp.gt.f32.partialorder %v734, 0.0
    %v738 = vmul.f32 %v732, 0.01
    %v739 = vmul.f32 %v734, 0.01
    %v740 = vsel %vm736, %v732, %v738
    %v741 = vsel %vm737, %v734, %v739
    %v742 = vld [vmem:[#allocation8] sm:$0xff]
    %v743 = vld [vmem:[#allocation8 + $0x8] sm:$0xff]
    %v744 = vld [vmem:[#allocation8 + $0x10] sm:$0xff]
    %v745 = vld [vmem:[#allocation8 + $0x18] sm:$0xff]
    %v746 = vld [vmem:[#allocation8 + $0x20] sm:$0xff]
    %v747 = vld [vmem:[#allocation8 + $0x28] sm:$0xff]
    %v748 = vld [vmem:[#allocation8 + $0x30] sm:$0xff]
    %v749 = vld [vmem:[#allocation8 + $0x38] sm:$0xff]
    %v750 = vld [vmem:[#allocation8 + $0x40] sm:$0xff]
    %v751 = vld [vmem:[#allocation8 + $0x48] sm:$0xff]
    %v752 = vld [vmem:[#allocation8 + $0x50] sm:$0xff]
    %v753 = vld [vmem:[#allocation8 + $0x58] sm:$0xff]
    %v754 = vld [vmem:[#allocation8 + $0x60] sm:$0xff]
    %v755 = vld [vmem:[#allocation8 + $0x68] sm:$0xff]
    %v756 = vld [vmem:[#allocation8 + $0x70] sm:$0xff]
    %v757 = vld [vmem:[#allocation8 + $0x78] sm:$0xff]
    %v758 = vld [vmem:[#allocation8 + $0x80] sm:$0xff]
    %v759 = vld [vmem:[#allocation8 + $0x88] sm:$0xff]
    %v760 = vld [vmem:[#allocation8 + $0x90] sm:$0xff]
    %v761 = vld [vmem:[#allocation8 + $0x98] sm:$0xff]
    %v762 = vld [vmem:[#allocation8 + $0xa0] sm:$0xff]
    %v763 = vld [vmem:[#allocation8 + $0xa8] sm:$0xff]
    %v764 = vld [vmem:[#allocation8 + $0xb0] sm:$0xff]
    %v765 = vld [vmem:[#allocation8 + $0xb8] sm:$0xff]
    %v766 = vld [vmem:[#allocation8 + $0xc0] sm:$0xff]
    %v767 = vld [vmem:[#allocation8 + $0xc8] sm:$0xff]
    %v768 = vld [vmem:[#allocation8 + $0xd0] sm:$0xff]
    %v769 = vld [vmem:[#allocation8 + $0xd8] sm:$0xff]
    %v770 = vld [vmem:[#allocation8 + $0xe0] sm:$0xff]
    %v771 = vld [vmem:[#allocation8 + $0xe8] sm:$0xff]
    %v772 = vld [vmem:[#allocation8 + $0xf0] sm:$0xff]
    %v773 = vld [vmem:[#allocation8 + $0xf8] sm:$0xff]
    %v774 = vld [vmem:[%s6] sm:$0x1]
    %v776 = vlaneseq
    %v777 = vshrl.u32 %v776, 7
    %v778 = vsub.s32 0, %v777
    %v779 = vrot.slane %v774, %v778
    %781 = vmatprep.subr.mxu0 0.0
    %782 = vmatpush1.msra.mxu0 %v742
    %783 = vmatprep.subr.mxu0 0.0
    %784 = vmatpush1.msra.mxu0 %v743
    %785 = vmatprep.subr.mxu0 0.0
    %786 = vmatpush1.msra.mxu0 %v744
    %787 = vmatprep.subr.mxu0 0.0
    %788 = vmatpush1.msra.mxu0 %v745
    %789 = vmatprep.subr.mxu0 0.0
    %790 = vmatpush1.msra.mxu0 %v746
    %791 = vmatprep.subr.mxu0 0.0
    %792 = vmatpush1.msra.mxu0 %v747
    %793 = vmatprep.subr.mxu0 0.0
    %794 = vmatpush1.msra.mxu0 %v748
    %795 = vmatprep.subr.mxu0 0.0
    %796 = vmatpush1.msra.mxu0 %v749
    %797 = vmatprep.subr.mxu0 0.0
    %798 = vmatpush1.msra.mxu0 %v750
    %799 = vmatprep.subr.mxu0 0.0
    %800 = vmatpush1.msra.mxu0 %v751
    %801 = vmatprep.subr.mxu0 0.0
    %802 = vmatpush1.msra.mxu0 %v752
    %803 = vmatprep.subr.mxu0 0.0
    %804 = vmatpush1.msra.mxu0 %v753
    %805 = vmatprep.subr.mxu0 0.0
    %806 = vmatpush1.msra.mxu0 %v754
    %807 = vmatprep.subr.mxu0 0.0
    %808 = vmatpush1.msra.mxu0 %v755
    %809 = vmatprep.subr.mxu0 0.0
    %810 = vmatpush1.msra.mxu0 %v756
    %811 = vmatprep.subr.mxu0 0.0
    %812 = vmatpush1.msra.mxu0 %v757
    %813 = vmatprep.subr.mxu0 0.0
    %814 = vmatpush1.msra.mxu0 %v758
    %815 = vmatprep.subr.mxu0 0.0
    %816 = vmatpush1.msra.mxu0 %v759
    %817 = vmatprep.subr.mxu0 0.0
    %818 = vmatpush1.msra.mxu0 %v760
    %819 = vmatprep.subr.mxu0 0.0
    %820 = vmatpush1.msra.mxu0 %v761
    %821 = vmatprep.subr.mxu0 0.0
    %822 = vmatpush1.msra.mxu0 %v762
    %823 = vmatprep.subr.mxu0 0.0
    %824 = vmatpush1.msra.mxu0 %v763
    %825 = vmatprep.subr.mxu0 0.0
    %826 = vmatpush1.msra.mxu0 %v764
    %827 = vmatprep.subr.mxu0 0.0
    %828 = vmatpush1.msra.mxu0 %v765
    %829 = vmatprep.subr.mxu0 0.0
    %830 = vmatpush1.msra.mxu0 %v766
    %831 = vmatprep.subr.mxu0 0.0
    %832 = vmatpush1.msra.mxu0 %v767
    %833 = vmatprep.subr.mxu0 0.0
    %834 = vmatpush1.msra.mxu0 %v768
    %835 = vmatprep.subr.mxu0 0.0
    %836 = vmatpush1.msra.mxu0 %v769
    %837 = vmatprep.subr.mxu0 0.0
    %838 = vmatpush1.msra.mxu0 %v770
    %839 = vmatprep.subr.mxu0 0.0
    %840 = vmatpush1.msra.mxu0 %v771
    %841 = vmatprep.subr.mxu0 0.0
    %842 = vmatpush1.msra.mxu0 %v772
    %843 = vmatprep.subr.mxu0 0.0
    %844 = vmatpush1.msra.mxu0 %v773
    %845 = vmatprep.mubr.f32.mxu0 %v741
    %846 = vmatmul.mubr.f32.gmra.mrb[0].mxu0 %v740
    %v847 = vpop.f32.mrb[0].mxu0
    %v848 = vadd.f32 %v779, %v847
    %v849 = vpop.f32.mrb[0].mxu0
    %850 = vdwg.mxu0
    %vm851 = vcmp.gt.f32.partialorder %v848, 0.0
    %v852 = vmul.f32 %v848, 0.01
    %v853 = vsel %vm851, %v848, %v852
    %854 = vst [vmem:[#allocation10] sm:$0xff] %v853
    // Predicated region
    $region46: #{tpu_custom_call.1} parent=1 // pred_check
      _
    $region47: #{tpu_custom_call.1} parent=1 // pred_check_branch
      %856 = sbr.rel (0) target = $region49
    $region48: #{tpu_custom_call.1} parent=1 // pred_region
      %s858 = ssub.s32 128, 128
      %859 = vsyncadd [#allocation4], %s858
      %s861 = sshll.u32 [#allocation10], 4
      %s862 = int_to_ptr.vmem [resolvable:$true] %s861
      %864 = dma.vmem_to_hbm [thread:$0]  %s862, 128, %s7, [#allocation4]
    $region49: #{tpu_custom_call.1} parent=1 // pred_fallthru
      _
    // Predicated region
    $region50: #{tpu_custom_call.1} parent=1 // pred_check
      _
    $region51: #{tpu_custom_call.1} parent=1 // pred_check_branch
      %866 = sbr.rel (0) target = $region53
    $region52: #{tpu_custom_call.1} parent=1 // pred_region
      %867 = dma.done [#allocation4], 128
    $region53: #{tpu_custom_call.1} parent=1 // pred_fallthru
      _
    %868 = vsyncpa [#allocation3], 1
    %869 = vsyncpa [#allocation6], 1
    %870 = vsyncpa [#allocation9], 1
    %871 = vsyncpa [#allocation4], 1

</llo_original>
